<compile_context>
chip_gen: v6e
topology: v6e:2x2x1
jax: 0.10.0
libtpu: 0.0.40
codegen_flags: <defaults>
</compile_context>

<pallas_src>
import functools

import jax
import jax.numpy as jnp
from jax import lax
from jax.experimental import pallas as pl
from jax.experimental.pallas import tpu as pltpu


def _round_up(x, m):
    return (x + m - 1) // m * m


def _vmem_budget():
    """Returns (mosaic vmem_limit_bytes, tile-picker budget), derived per chip."""
    cap = 64 * 1024 * 1024                       # conservative fallback (v7x per-TC)
    try:
        cap = int(getattr(pltpu.get_tpu_info(), "vmem_capacity_bytes", cap))
    except Exception:
        pass
    limit = min(int(cap * 0.75), 96 * 1024 * 1024)        # 96 MiB v5e/v6e, 48 MiB v7x
    tile_budget = min(int(cap * 0.30), 40 * 1024 * 1024)  # ~38 MiB v6e, ~19 MiB v7x
    return limit, tile_budget


def _pick_tile_m(KD, Cpad, Cout, path, out_bytes, budget):
    """Largest M-tile whose double-buffered working set fits the per-chip budget."""
    w_bytes = KD * Cpad * 2 * 2                  # resident bf16 weight, double-buffered
    for tm in (4096, 2048, 1024, 512, 256, 128):
        if path == "store":
            p1 = (tm * KD * 2 + tm * Cout * 2 + 8 * Cout * 4) * 2 + w_bytes
            p2 = (tm * Cout * 2 + tm * Cout * out_bytes + 2 * Cout * 4) * 2
        else:
            p1 = (tm * KD * 2 + 8 * Cout * 4) * 2 + w_bytes
            p2 = (tm * KD * 2 + tm * Cout * out_bytes + 2 * Cout * 4) * 2 + w_bytes
        work = max(p1, p2) + tm * Cpad * 4       # + f32 dot accumulator in VMEM
        if work <= budget:
            return tm
    return 128


# ------------------------------ in-kernel helpers ------------------------------
def _tile_stats(y, out_w):
    """One (8, out_w) block: per-tile sum in sublanes 0-3, sum-of-squares in 4-7."""
    s = jnp.sum(y, axis=0, keepdims=True)             # (1, out_w) f32
    sq = jnp.sum(y * y, axis=0, keepdims=True)        # (1, out_w) f32
    row = lax.broadcasted_iota(jnp.int32, (8, out_w), 0)
    return jnp.where(row < 4,
                     jnp.broadcast_to(s, (8, out_w)),
                     jnp.broadcast_to(sq, (8, out_w)))


# ------------------------------ Pallas kernels ------------------------------
def _conv_stats_kernel(x_ref, w_ref, stats_ref, *, out_w):
    # (TM, KD) @ (KD, Cpad) on the MXU with f32 accumulation; stats only.
    y = jnp.dot(x_ref[...], w_ref[...], preferred_element_type=jnp.float32)[:, :out_w]
    stats_ref[...] = _tile_stats(y, out_w)


def _conv_store_stats_kernel(x_ref, w_ref, y_ref, stats_ref, *, out_w):
    y = jnp.dot(x_ref[...], w_ref[...], preferred_element_type=jnp.float32)[:, :out_w]
    y_ref[...] = y.astype(y_ref.dtype)                # bf16 intermediate (half the bytes)
    stats_ref[...] = _tile_stats(y, out_w)            # from the f32 accumulator -> exact


def _affine_relu_kernel(y_ref, scale_ref, shift_ref, o_ref, *, activation):
    y = y_ref[...].astype(jnp.float32) * scale_ref[...] + shift_ref[...]
    if activation:
        y = jnp.maximum(y, 0.0)
    o_ref[...] = y.astype(o_ref.dtype)


def _conv_affine_relu_kernel(x_ref, w_ref, scale_ref, shift_ref, o_ref, *,
                             out_w, activation):
    y = jnp.dot(x_ref[...], w_ref[...], preferred_element_type=jnp.float32)[:, :out_w]
    y = y * scale_ref[...] + shift_ref[...]
    if activation:
        y = jnp.maximum(y, 0.0)
    o_ref[...] = y.astype(o_ref.dtype)


# ------------------------------ wrappers ------------------------------
def convolution_block_nhwc(x_nhwc, weight_oihw, bias, gamma, beta, *,
                           stride, activation=True, batch_norm=True, eps=1e-5,
                           tm=None, out_dtype=jnp.float32, path=None):
    """Forward pass, NHWC in / NHWC out (preferred when chaining blocks;
    pass out_dtype=jnp.bfloat16 in that case to halve the final store traffic)."""
    N, H, W, Cin = x_nhwc.shape
    Cout, _, K, _ = weight_oihw.shape
    pad = K // 2
    OH = (H + 2 * pad - K) // stride + 1
    OW = (W + 2 * pad - K) // stride + 1
    M = N * OH * OW
    KD = K * K * Cin
    Cpad = _round_up(Cout, 128)       # lane-dense MXU weight width

    # Path heuristic: re-reading the im2col costs 2*KD B/row; a bf16 intermediate
    # costs ~4*Cout B/row -> recompute wins whenever KD < 2*Cpad.
    if path is None:
        path = "recompute" if KD < 2 * Cpad else "store"
    if not batch_norm:
        path = "recompute"            # no stats needed -> single fused pass
    assert path in ("store", "recompute")

    vmem_limit, tile_budget = _vmem_budget()
    out_bytes = jnp.dtype(out_dtype).itemsize
    if tm is None:
        tm = _pick_tile_m(KD, Cpad, Cout, path, out_bytes, tile_budget)
    m128 = _round_up(M, 128)
    tm = min(tm, m128)
    if m128 >= 256:                   # keep >= 2 parallel tiles for v7x's 2 TCs
        tm = min(tm, _round_up(m128 // 2, 128))
    tm = max(128, _round_up(tm, 128))
    M_pad = _round_up(M, tm)
    nt = M_pad // tm

    # ---- glue: im2col patch extraction (NHWC), bf16 operands for the MXU ----
    xp = jnp.pad(x_nhwc, ((0, 0), (pad, pad), (pad, pad), (0, 0)))
    patches = []
    for dy in range(K):
        for dx in range(K):
            patches.append(
                xp[:, dy:dy + OH * stride:stride, dx:dx + OW * stride:stride, :])
    cols = jnp.concatenate(patches, axis=-1).reshape(M, KD)
    cols = jnp.pad(cols, ((0, M_pad - M), (0, 0))).astype(jnp.bfloat16)

    # weight (Cout, Cin, K, K) -> (K*K*Cin, Cpad) bf16 (zero-padded lanes).
    w2 = jnp.transpose(weight_oihw, (2, 3, 1, 0)).reshape(KD, Cout)
    w2 = jnp.pad(w2, ((0, 0), (0, Cpad - Cout))).astype(jnp.bfloat16)

    cparams = pltpu.CompilerParams(dimension_semantics=("parallel",),
                                   vmem_limit_bytes=vmem_limit)

    x_spec = pl.BlockSpec((tm, KD), lambda i: (i, 0))
    w_spec = pl.BlockSpec((KD, Cpad), lambda i: (0, 0))   # resident weight block
    stats_spec = pl.BlockSpec((8, Cout), lambda i: (i, 0))
    vec_spec = pl.BlockSpec((1, Cout), lambda i: (0, 0))
    mo_spec = pl.BlockSpec((tm, Cout), lambda i: (i, 0))

    # ---- pass 1 (+ glue): BN batch statistics -> folded per-channel scale/shift ----
    y_bf16 = None
    if batch_norm:
        if path == "store":
            y_bf16, stats = pl.pallas_call(
                functools.partial(_conv_store_stats_kernel, out_w=Cout),
                out_shape=(jax.ShapeDtypeStruct((M_pad, Cout), jnp.bfloat16),
                           jax.ShapeDtypeStruct((nt * 8, Cout), jnp.float32)),
                grid_spec=pl.GridSpec(grid=(nt,),
                                      in_specs=[x_spec, w_spec],
                                      out_specs=(mo_spec, stats_spec)),
                compiler_params=cparams,
            )(cols, w2)
        else:
            stats = pl.pallas_call(
                functools.partial(_conv_stats_kernel, out_w=Cout),
                out_shape=jax.ShapeDtypeStruct((nt * 8, Cout), jnp.float32),
                grid_spec=pl.GridSpec(grid=(nt,),
                                      in_specs=[x_spec, w_spec],
                                      out_specs=stats_spec),
                compiler_params=cparams,
            )(cols, w2)
        st = stats.reshape(nt, 8, Cout)
        sums = st[:, 0, :].sum(axis=0)     # zero-padded rows contribute 0 -> exact
        sqs = st[:, 4, :].sum(axis=0)
        mean = sums / M
        # TODO(synk): E[y^2]-E[y]^2 loses precision when |mean| >> std; switch to
        #             per-tile centered partials (Chan's formula) if that regime matters.
        var = jnp.maximum(sqs / M - mean * mean, 0.0)   # biased var (PyTorch train-mode BN)
        scale = gamma.astype(jnp.float32) * lax.rsqrt(var + eps)
        shift = beta.astype(jnp.float32) - mean * scale
        # Conv bias is cancelled exactly by the BN mean subtraction -> not added.
    else:
        scale = jnp.ones((Cout,), jnp.float32)
        shift = bias.astype(jnp.float32)
    scale = scale.reshape(1, Cout)
    shift = shift.reshape(1, Cout)

    # ---- pass 2: folded affine + ReLU (reading bf16 y, or recomputing the matmul) ----
    if path == "store":
        out = pl.pallas_call(
            functools.partial(_affine_relu_kernel, activation=activation),
            out_shape=jax.ShapeDtypeStruct((M_pad, Cout), out_dtype),
            grid_spec=pl.GridSpec(grid=(nt,),
                                  in_specs=[mo_spec, vec_spec, vec_spec],
                                  out_specs=mo_spec),
            compiler_params=cparams,
        )(y_bf16, scale, shift)
    else:
        out = pl.pallas_call(
            functools.partial(_conv_affine_relu_kernel, out_w=Cout,
                              activation=activation),
            out_shape=jax.ShapeDtypeStruct((M_pad, Cout), out_dtype),
            grid_spec=pl.GridSpec(grid=(nt,),
                                  in_specs=[x_spec, w_spec, vec_spec, vec_spec],
                                  out_specs=mo_spec),
            compiler_params=cparams,
        )(cols, w2, scale, shift)

    return out[:M].reshape(N, OH, OW, Cout)


def convolution_block(x_nchw, weight_oihw, bias, gamma, beta, *,
                      stride, activation=True, batch_norm=True, eps=1e-5,
                      tm=None, out_dtype=jnp.float32, path=None):
    """Forward pass of ConvolutionBlock, NCHW in / NCHW out (PyTorch convention).
    When chaining blocks, prefer convolution_block_nhwc (avoids layout round-trips)."""
    x_nhwc = jnp.transpose(x_nchw, (0, 2, 3, 1))
    out = convolution_block_nhwc(x_nhwc, weight_oihw, bias, gamma, beta,
                                 stride=stride, activation=activation,
                                 batch_norm=batch_norm, eps=eps, tm=tm,
                                 out_dtype=out_dtype, path=path)
    return jnp.transpose(out, (0, 3, 1, 2))


# ------------------------------ reference & demo ------------------------------
def _reference(x_nchw, weight_oihw, bias, gamma, beta, *, stride, eps=1e-5):
    """Pure-JAX reference matching the PyTorch module (training-mode BN).
    Operands are rounded to bf16 (like the MXU path) so the comparison checks the
    kernel structure, not f32-vs-bf16 operand precision."""
    K = weight_oihw.shape[-1]
    pad = K // 2
    xr = x_nchw.astype(jnp.bfloat16).astype(jnp.float32)
    wr = weight_oihw.astype(jnp.bfloat16).astype(jnp.float32)
    y = lax.conv_general_dilated(
        xr, wr, window_strides=(stride, stride),
        padding=((pad, pad), (pad, pad)),
        dimension_numbers=("NCHW", "OIHW", "NCHW"))
    y = y + bias.reshape(1, -1, 1, 1)
    mean = jnp.mean(y, axis=(0, 2, 3), keepdims=True)
    var = jnp.mean((y - mean) ** 2, axis=(0, 2, 3), keepdims=True)
    y = (y - mean) * lax.rsqrt(var + eps)
    y = y * gamma.reshape(1, -1, 1, 1) + beta.reshape(1, -1, 1, 1)
    return jnp.maximum(y, 0.0)


if __name__ == "__main__":
    # ConvolutionBlock(filter_in=4, filter_out=8, conv_size=3, conv_stride=1,
    #                  activation=True, pooling=False, batch_norm=True)
    key = jax.random.PRNGKey(0)
    k_x, k_w, k_b = jax.random.split(key, 3)

    N, Cin, H, W = 2, 4, 16, 16
    Cout, K, stride = 8, 3, 1

    x = jax.random.normal(k_x, (N, Cin, H, W), dtype=jnp.float32)
    fan_in = Cin * K * K
    bound = 1.0 / (fan_in ** 0.5)
    weight = jax.random.uniform(k_w, (Cout, Cin, K, K), jnp.float32, -bound, bound)
    bias = jax.random.uniform(k_b, (Cout,), jnp.float32, -bound, bound)
    gamma = jnp.ones((Cout,), jnp.float32)   # BatchNorm2d weight init
    beta = jnp.zeros((Cout,), jnp.float32)   # BatchNorm2d bias init

    ref = _reference(x, weight, bias, gamma, beta, stride=stride)

    # 1) Auto path (recompute here: KD=36 < 2*Cpad) -- conv activation never hits HBM.
    out_a = convolution_block(x, weight, bias, gamma, beta, stride=stride,
                              activation=True, batch_norm=True)
    out_a = jax.block_until_ready(out_a)
    assert out_a.shape == (N, Cout, H, W), out_a.shape
    assert jnp.allclose(out_a, ref, rtol=2e-3, atol=2e-3), \
        float(jnp.max(jnp.abs(out_a - ref)))

    # 2) Forced "store" path with tm=128 (4 tiles): exercises the bf16 activation
    #    round-trip and the cross-tile BN stat reduction.  Looser tolerance covers
    #    the bf16 (2^-8 relative) inter-pass storage of the activation.
    out_b = convolution_block(x, weight, bias, gamma, beta, stride=stride,
                              activation=True, batch_norm=True,
                              tm=128, path="store")
    out_b = jax.block_until_ready(out_b)
    assert out_b.shape == (N, Cout, H, W), out_b.shape
    assert jnp.allclose(out_b, ref, rtol=2e-2, atol=2e-2), \
        float(jnp.max(jnp.abs(out_b - ref)))

    print("KERNEL_OK")
</pallas_src>

<mosaic_0001>
module attributes {stable_mosaic.version = 11 : i64} {
  func.func @_conv_stats_kernel(%arg0: i32, %arg1: memref<256x36xbf16, #tpu.memory_space<vmem>>, %arg2: memref<36x128xbf16, #tpu.memory_space<vmem>>, %arg3: memref<8x8xf32, #tpu.memory_space<vmem>>) attributes {dimension_semantics = [#tpu.dimension_semantics<parallel>], iteration_bounds = array<i64: 2>, scalar_prefetch = 0 : i64, scratch_operands = 0 : i64, tpu.core_type = #tpu.core_type<tc>, window_params = [{transform_indices = @transform_0, window_bounds = array<i64: 256, 36>}, {pipeline_mode = #tpu.pipeline_mode<synchronous>, transform_indices = @transform_1, window_bounds = array<i64: 36, 128>}, {transform_indices = @transform_2, window_bounds = array<i64: 8, 8>}]} {
    %c0 = arith.constant 0 : index
    %c0_0 = arith.constant 0 : index
    %0 = vector.load %arg1[%c0, %c0_0] : memref<256x36xbf16, #tpu.memory_space<vmem>>, vector<256x36xbf16>
    %c0_1 = arith.constant 0 : index
    %c0_2 = arith.constant 0 : index
    %1 = vector.load %arg2[%c0_1, %c0_2] : memref<36x128xbf16, #tpu.memory_space<vmem>>, vector<36x128xbf16>
    %cst = arith.constant dense<0.000000e+00> : vector<256x128xf32>
    %2 = tpu.matmul %0, %1, %cst {dimension_numbers = #tpu.dot_dimension_numbers<[1], [0], [0], [1], [0, 0, 1, 1], [], []>} : vector<256x36xbf16>, vector<36x128xbf16>, vector<256x128xf32> -> vector<256x128xf32>
    %3 = vector.extract_strided_slice %2 {offsets = [0, 0], sizes = [256, 8], strides = [1, 1]} : vector<256x128xf32> to vector<256x8xf32>
    %cst_3 = arith.constant dense<0.000000e+00> : vector<8xf32>
    %4 = vector.multi_reduction <add>, %3, %cst_3 [0] : vector<256x8xf32> to vector<8xf32>
    %5 = vector.shape_cast %4 : vector<8xf32> to vector<1x8xf32>
    %6 = arith.mulf %3, %3 : vector<256x8xf32>
    %cst_4 = arith.constant dense<0.000000e+00> : vector<8xf32>
    %7 = vector.multi_reduction <add>, %6, %cst_4 [0] : vector<256x8xf32> to vector<8xf32>
    %8 = vector.shape_cast %7 : vector<8xf32> to vector<1x8xf32>
    %9 = tpu.iota {dimensions = array<i32: 0>} : vector<8x8xi32>
    %c4_i32 = arith.constant 4 : i32
    %10 = vector.broadcast %c4_i32 : i32 to vector<8x8xi32>
    %11 = arith.cmpi slt, %9, %10 : vector<8x8xi32>
    %12 = vector.shape_cast %5 : vector<1x8xf32> to vector<1x8xf32>
    %13 = vector.broadcast %12 : vector<1x8xf32> to vector<8x8xf32>
    %14 = vector.shape_cast %8 : vector<1x8xf32> to vector<1x8xf32>
    %15 = vector.broadcast %14 : vector<1x8xf32> to vector<8x8xf32>
    %16 = arith.select %11, %13, %15 : vector<8x8xi1>, vector<8x8xf32>
    %c0_5 = arith.constant 0 : index
    %c0_6 = arith.constant 0 : index
    %17 = vector.load %arg3[%c0_5, %c0_6] : memref<8x8xf32, #tpu.memory_space<vmem>>, vector<8x8xf32>
    tpu.vector_store %arg3[%c0_5, %c0_6], %16 {strides = array<i32>} : memref<8x8xf32, #tpu.memory_space<vmem>>, vector<8x8xf32>,
    return
  }
  func.func @transform_0(%arg0: i32) -> (i32, i32) {
    %c0_i32 = arith.constant 0 : i32
    %c0_i32_0 = arith.constant 0 : i32
    return %arg0, %c0_i32 : i32, i32
  }
  func.func @transform_1(%arg0: i32) -> (i32, i32) {
    %c0_i32 = arith.constant 0 : i32
    %c0_i32_0 = arith.constant 0 : i32
    %c0_i32_1 = arith.constant 0 : i32
    return %c0_i32, %c0_i32_0 : i32, i32
  }
  func.func @transform_2(%arg0: i32) -> (i32, i32) {
    %c0_i32 = arith.constant 0 : i32
    %c0_i32_0 = arith.constant 0 : i32
    return %arg0, %c0_i32 : i32, i32
  }
}

</mosaic_0001>

<llo_original>
// kernel: tpu_custom_call.1
$region0: #{tpu_custom_call.1}
  #allocation0 [shape = 'u32[]', space=smem, size = 0x4, offset = 0x4, fixed_abs, tag = 'smem constant byte address 0x4 - core index']
  #allocation1 [shape = 'u32[144,128]{1,0:T(1,128)}', space=vmem, size = 0x12000, scoped, tag = 'internal scratch']
  %s0 = inlined_call_operand.vmem [shape: bf16[512,36], index: 0, kind: input, shape index: {}]
  %s1 = inlined_call_operand.vmem [shape: bf16[36,128], index: 1, kind: input, shape index: {}]
  %s2 = inlined_call_operand.vmem [shape: f32[16,8], index: 2, kind: output, shape index: {}]
  %s3 = sld [smem:[#allocation0]]
  $region41: #{tpu_custom_call.1} parent=0
    _
  %s5 = ssub.s32 1, %s3
  %s6 = scalar_select 0, %s5, %s3
  loop: start=0, step=1, limit=4
  $region2: #{tpu_custom_call.1} parent=0 // loop_pre_header
    _
  $region3: #{tpu_custom_call.1} parent=0 // loop_header
    %s8 = sphi 0, %s12
    %p9 = scmp.ge.s32.totalorder %s8, 4
    %s18 = sphi 0, %s20
    %s21 = sphi 0, %s18
    %s22 = sphi 0, %s21
    %s38 = sphi 0, %s22
    %s42 = sphi 0, %s42
    %s44 = sphi 0, %s42
    %s45 = sphi 0, %s44
    %s59 = sphi 0, %s45
    %s65 = sphi 0, %s67
    %s68 = sphi 0, %s65
    %s69 = sphi 0, %s68
    %s85 = sphi 0, %s69
  $region4: #{tpu_custom_call.1} parent=0 // loop_header_branch
    %11 = sbr.rel (%p9) target = $region8
  $region5: #{tpu_custom_call.1} parent=0 // loop_body
    %s13 = ssub.s32 %s8, 1
    %s14 = ssub.s32 %s8, 2
    %s15 = sadd.s32 %s8, 1
    %s16 = ssub.s32 %s8, %s15
    %p17 = scmp.eq.s32.totalorder %s16, 0
    %s19 = sadd.s32 %s18, 1
    %s20 = scalar_select %p17, %s18, %s19
    %p23 = pneg %p17
    %p24 = scmp.eq.s32.totalorder %s8, 1
    %p25 = por %p23, %p24
    %p26 = scmp.ne.s32.totalorder %s18, %s21
    %p27 = scmp.eq.s32.totalorder %s8, 0
    %p28 = por %p26, %p27
    %p29 = scmp.ne.s32.totalorder %s18, %s21
    %p30 = scmp.eq.s32.totalorder %s13, 1
    %p31 = por %p29, %p30
    %p32 = scmp.ne.s32.totalorder %s21, %s22
    %p33 = scmp.eq.s32.totalorder %s13, 0
    %p34 = por %p32, %p33
    %p35 = scmp.ne.s32.totalorder %s21, %s22
    %p36 = scmp.eq.s32.totalorder %s14, 1
    %p37 = por %p35, %p36
    %p39 = scmp.ne.s32.totalorder %s22, %s38
    %p40 = scmp.eq.s32.totalorder %s14, 0
    %p41 = por %p39, %p40
    %s43 = sadd.s32 %s42, 1
    %p46 = scmp.eq.s32.totalorder %s8, 1
    %p47 = scmp.ne.s32.totalorder %s42, %s44
    %p48 = scmp.eq.s32.totalorder %s8, 0
    %p49 = por %p47, %p48
    %p50 = scmp.ne.s32.totalorder %s42, %s44
    %p51 = scmp.eq.s32.totalorder %s13, 1
    %p52 = por %p50, %p51
    %p53 = scmp.ne.s32.totalorder %s44, %s45
    %p54 = scmp.eq.s32.totalorder %s13, 0
    %p55 = por %p53, %p54
    %p56 = scmp.ne.s32.totalorder %s44, %s45
    %p57 = scmp.eq.s32.totalorder %s14, 1
    %p58 = por %p56, %p57
    %p60 = scmp.ne.s32.totalorder %s45, %s59
    %p61 = scmp.eq.s32.totalorder %s14, 0
    %p62 = por %p60, %p61
    %s63 = ssub.s32 %s8, %s15
    %p64 = scmp.eq.s32.totalorder %s63, 0
    %s66 = sadd.s32 %s65, 1
    %s67 = scalar_select %p64, %s65, %s66
    %p70 = pneg %p64
    %p71 = scmp.eq.s32.totalorder %s8, 1
    %p72 = por %p70, %p71
    %p73 = scmp.ne.s32.totalorder %s65, %s68
    %p74 = scmp.eq.s32.totalorder %s8, 0
    %p75 = por %p73, %p74
    %p76 = scmp.ne.s32.totalorder %s65, %s68
    %p77 = scmp.eq.s32.totalorder %s13, 1
    %p78 = por %p76, %p77
    %p79 = scmp.ne.s32.totalorder %s68, %s69
    %p80 = scmp.eq.s32.totalorder %s13, 0
    %p81 = por %p79, %p80
    %p82 = scmp.ne.s32.totalorder %s68, %s69
    %p83 = scmp.eq.s32.totalorder %s14, 1
    %p84 = por %p82, %p83
    %p86 = scmp.ne.s32.totalorder %s69, %s85
    %p87 = scmp.eq.s32.totalorder %s14, 0
    %p88 = por %p86, %p87
    %p89 = scmp.le.s32.totalorder 1, %s8
    %p90 = scmp.lt.s32.totalorder %s8, 3
    %p91 = pnand %p89, %p90
    %p92 = pneg %p91
    // Predicated region
    $region9: #{tpu_custom_call.1} parent=5 // pred_check
      _
    $region10: #{tpu_custom_call.1} parent=5 // pred_check_branch
      %94 = sbr.rel (%p91) target = $region12
    $region11: #{tpu_custom_call.1} parent=5 // pred_region
      %s95 = ssub.s32 %s8, 1
      // Predicated region
      $region13: #{tpu_custom_call.1} parent=11 // pred_check
        %p96 = pneg %p55
      $region14: #{tpu_custom_call.1} parent=11 // pred_check_branch
        %98 = sbr.rel (%p96) target = $region16
      $region15: #{tpu_custom_call.1} parent=11 // pred_region
        _
      $region16: #{tpu_custom_call.1} parent=11 // pred_fallthru
        _
    $region12: #{tpu_custom_call.1} parent=5 // pred_fallthru
      _
    %p99 = scmp.lt.s32.totalorder %s8, 2
    // Predicated region
    $region17: #{tpu_custom_call.1} parent=5 // pred_check
      %p100 = pneg %p99
    $region18: #{tpu_custom_call.1} parent=5 // pred_check_branch
      %102 = sbr.rel (%p100) target = $region20
    $region19: #{tpu_custom_call.1} parent=5 // pred_region
      // Predicated region
      $region21: #{tpu_custom_call.1} parent=19 // pred_check
        %p103 = pneg %p28
      $region22: #{tpu_custom_call.1} parent=19 // pred_check_branch
        %105 = sbr.rel (%p103) target = $region24
      $region23: #{tpu_custom_call.1} parent=19 // pred_region
        %s106 = smul.u32 32, %s8
        %p107 = scmp.lt.s32.totalorder %s106, 63
        %s108 = scalar_select %p107, %s106, 63
        %s109 = smul.addr %s108, 4
        %s110 = scalar_lea.vmem %s0, %s109
        %s111 = smul.u32 32, %s8
      $region24: #{tpu_custom_call.1} parent=19 // pred_fallthru
        _
    $region20: #{tpu_custom_call.1} parent=5 // pred_fallthru
      _
    %p112 = scmp.le.s32.totalorder 1, %s8
    %p113 = scmp.lt.s32.totalorder %s8, 3
    %p114 = pnand %p112, %p113
    %p115 = pneg %p114
    // Predicated region
    $region25: #{tpu_custom_call.1} parent=5 // pred_check
      _
    $region26: #{tpu_custom_call.1} parent=5 // pred_check_branch
      %117 = sbr.rel (%p114) target = $region28
    $region27: #{tpu_custom_call.1} parent=5 // pred_region
      %s118 = ssub.s32 %s8, 1
      %s119 = smul.u32 32, %s13
      %p120 = scmp.lt.s32.totalorder %s119, 63
      %s121 = scalar_select %p120, %s119, 63
      %s122 = smul.addr %s121, 4
      %s123 = scalar_lea.vmem %s0, %s122
      %p124 = pneg %p34
      %p125 = pneg %p31
      %p126 = pneg %p55
      %p127 = pneg %p52
      %p128 = pneg %p81
      %p129 = pneg %p78
      %p130 = scmp.lt.s32.totalorder %s13, 1
      %s131 = scalar_select %p130, %s13, 1
      %s132 = smul.addr %s131, 8
      %s133 = scalar_lea.vmem %s2, %s132
      %s134 = smul.u32 32, %s13
      %p135 = scmp.lt.s32.totalorder %s134, 63
      %s136 = scalar_select %p135, %s134, 63
      %s137 = smul.addr %s136, 4
      %s138 = scalar_lea.vmem %s0, %s137
      %s139 = smul.u32 32, %s13
      %p140 = scmp.lt.s32.totalorder %s13, 1
      %s141 = scalar_select %p140, %s13, 1
      %s142 = smul.addr %s141, 8
      %s143 = scalar_lea.vmem %s2, %s142
      %v145 = vld [vmem:[%s138] sm:$0xf]
      %v146 = vld [vmem:[%s138 + $0x4] sm:$0xf]
      %v147 = vld [vmem:[%s138 + $0x8] sm:$0xf]
      %v148 = vld [vmem:[%s138 + $0xc] sm:$0xf]
      %v149 = vld [vmem:[%s138 + $0x10] sm:$0xf]
      %v150 = vld [vmem:[%s138 + $0x14] sm:$0xf]
      %v151 = vld [vmem:[%s138 + $0x18] sm:$0xf]
      %v152 = vld [vmem:[%s138 + $0x1c] sm:$0xf]
      %v153 = vld [vmem:[%s138 + $0x20] sm:$0xf]
      %v154 = vld [vmem:[%s138 + $0x24] sm:$0xf]
      %v155 = vld [vmem:[%s138 + $0x28] sm:$0xf]
      %v156 = vld [vmem:[%s138 + $0x2c] sm:$0xf]
      %v157 = vld [vmem:[%s138 + $0x30] sm:$0xf]
      %v158 = vld [vmem:[%s138 + $0x34] sm:$0xf]
      %v159 = vld [vmem:[%s138 + $0x38] sm:$0xf]
      %v160 = vld [vmem:[%s138 + $0x3c] sm:$0xf]
      %v161 = vld [vmem:[%s138 + $0x40] sm:$0xf]
      %v162 = vld [vmem:[%s138 + $0x44] sm:$0xf]
      %v163 = vld [vmem:[%s138 + $0x48] sm:$0xf]
      %v164 = vld [vmem:[%s138 + $0x4c] sm:$0xf]
      %v165 = vld [vmem:[%s138 + $0x50] sm:$0xf]
      %v166 = vld [vmem:[%s138 + $0x54] sm:$0xf]
      %v167 = vld [vmem:[%s138 + $0x58] sm:$0xf]
      %v168 = vld [vmem:[%s138 + $0x5c] sm:$0xf]
      %v169 = vld [vmem:[%s138 + $0x60] sm:$0xf]
      %v170 = vld [vmem:[%s138 + $0x64] sm:$0xf]
      %v171 = vld [vmem:[%s138 + $0x68] sm:$0xf]
      %v172 = vld [vmem:[%s138 + $0x6c] sm:$0xf]
      %v173 = vld [vmem:[%s138 + $0x70] sm:$0xf]
      %v174 = vld [vmem:[%s138 + $0x74] sm:$0xf]
      %v175 = vld [vmem:[%s138 + $0x78] sm:$0xf]
      %v176 = vld [vmem:[%s138 + $0x7c] sm:$0xf]
      %v177 = vld [vmem:[%s1] sm:$0xf]
      %v178 = vld [vmem:[%s1 + $0x4] sm:$0xf]
      %v179 = vld [vmem:[%s1 + $0x8] sm:$0xf]
      %v180 = vld [vmem:[%s1 + $0xc] sm:$0xf]
      %v181 = vld [vmem:[%s1 + $0x10] sm:$0x3]
      %v214 = vunpack.c.l.b16 %v145
      %v215 = vunpack.c.l.b16 %v146
      %v216 = vunpack.c.l.b16 %v147
      %v217 = vunpack.c.l.b16 %v148
      %v218 = vunpack.c.l.b16 %v149
      %v219 = vunpack.c.l.b16 %v150
      %v220 = vunpack.c.l.b16 %v151
      %v221 = vunpack.c.l.b16 %v152
      %v222 = vunpack.c.l.b16 %v153
      %v223 = vunpack.c.l.b16 %v154
      %v224 = vunpack.c.l.b16 %v155
      %v225 = vunpack.c.l.b16 %v156
      %v226 = vunpack.c.l.b16 %v157
      %v227 = vunpack.c.l.b16 %v158
      %v228 = vunpack.c.l.b16 %v159
      %v229 = vunpack.c.l.b16 %v160
      %v230 = vunpack.c.l.b16 %v161
      %v231 = vunpack.c.l.b16 %v162
      %v232 = vunpack.c.l.b16 %v163
      %v233 = vunpack.c.l.b16 %v164
      %v234 = vunpack.c.l.b16 %v165
      %v235 = vunpack.c.l.b16 %v166
      %v236 = vunpack.c.l.b16 %v167
      %v237 = vunpack.c.l.b16 %v168
      %v238 = vunpack.c.l.b16 %v169
      %v239 = vunpack.c.l.b16 %v170
      %v240 = vunpack.c.l.b16 %v171
      %v241 = vunpack.c.l.b16 %v172
      %v242 = vunpack.c.l.b16 %v173
      %v243 = vunpack.c.l.b16 %v174
      %v244 = vunpack.c.l.b16 %v175
      %v245 = vunpack.c.l.b16 %v176
      %v246 = vpack.c.b16 %v215, %v214
      %v247 = vpack.c.b16 %v217, %v216
      %v248 = vpack.c.b16 %v219, %v218
      %v249 = vpack.c.b16 %v221, %v220
      %v250 = vpack.c.b16 %v223, %v222
      %v251 = vpack.c.b16 %v225, %v224
      %v252 = vpack.c.b16 %v227, %v226
      %v253 = vpack.c.b16 %v229, %v228
      %v254 = vpack.c.b16 %v231, %v230
      %v255 = vpack.c.b16 %v233, %v232
      %v256 = vpack.c.b16 %v235, %v234
      %v257 = vpack.c.b16 %v237, %v236
      %v258 = vpack.c.b16 %v239, %v238
      %v259 = vpack.c.b16 %v241, %v240
      %v260 = vpack.c.b16 %v243, %v242
      %v261 = vpack.c.b16 %v245, %v244
      %v267 = vunpack.c.l.b16 %v177
      %v268 = vunpack.c.l.b16 %v178
      %v269 = vunpack.c.l.b16 %v179
      %v270 = vunpack.c.l.b16 %v180
      %v271 = vunpack.c.l.b16 %v181
      %v272 = vpack.c.b16 %v268, %v267
      %v273 = vpack.c.b16 %v270, %v269
      %v274 = vpack.c.b16 %v271, %v271
      %vm277 = vcmask 293888
      %v279 = vsel %vm277, %v246, 0
      %v282 = vsel %vm277, %v247, 0
      %v285 = vsel %vm277, %v248, 0
      %v288 = vsel %vm277, %v249, 0
      %v291 = vsel %vm277, %v250, 0
      %v294 = vsel %vm277, %v251, 0
      %v297 = vsel %vm277, %v252, 0
      %v300 = vsel %vm277, %v253, 0
      %v303 = vsel %vm277, %v254, 0
      %v306 = vsel %vm277, %v255, 0
      %v309 = vsel %vm277, %v256, 0
      %v312 = vsel %vm277, %v257, 0
      %v315 = vsel %vm277, %v258, 0
      %v318 = vsel %vm277, %v259, 0
      %v321 = vsel %vm277, %v260, 0
      %v324 = vsel %vm277, %v261, 0
      %vm326 = vcmask 1041408
      %v328 = vsel %vm326, %v274, 0
      %330 = vmatprep.subr.bf16.mxu0 0
      %331 = vmatpush1.bf16.msra.mxu0 0
      %332 = vmatprep.subr.bf16.mxu0 0
      %333 = vmatpush1.bf16.msra.mxu0 0
      %334 = vmatprep.subr.bf16.mxu0 0
      %335 = vmatpush1.bf16.msra.mxu0 0
      %336 = vmatprep.subr.bf16.mxu0 0
      %337 = vmatpush1.bf16.msra.mxu0 0
      %338 = vmatprep.subr.bf16.mxu0 0
      %339 = vmatpush1.bf16.msra.mxu0 0
      %340 = vmatprep.subr.bf16.mxu0 0
      %341 = vmatpush1.bf16.msra.mxu0 %v328
      %342 = vmatprep.subr.bf16.mxu0 0
      %343 = vmatpush1.bf16.msra.mxu0 %v273
      %344 = vmatprep.subr.bf16.mxu0 0
      %345 = vmatpush1.bf16.msra.mxu0 %v272
      %346 = vmatprep.subr.bf16.mxu0 0
      %347 = vmatpush2.bf16.msra.mxu0 0
      %348 = vmatprep.subr.bf16.mxu0 0
      %349 = vmatpush2.bf16.msra.mxu0 0
      %350 = vmatprep.subr.bf16.mxu0 0
      %351 = vmatpush2.bf16.msra.mxu0 0
      %352 = vmatprep.subr.bf16.mxu0 0
      %353 = vmatpush2.bf16.msra.mxu0 0
      %354 = vmatprep.subr.bf16.mxu0 0
      %355 = vmatpush2.bf16.msra.mxu0 0
      %356 = vmatprep.subr.bf16.mxu0 0
      %357 = vmatpush2.bf16.msra.mxu0 0
      %358 = vmatprep.subr.bf16.mxu0 0
      %359 = vmatpush2.bf16.msra.mxu0 0
      %360 = vmatprep.subr.bf16.mxu0 0
      %361 = vmatpush2.bf16.msra.mxu0 0
      %362 = vmatprep.mubr.bf16.mxu0 0
      %363 = vmatmul.mubr.bf16.gmra.mxu0 %v279
      %v364 = vpop.f32.mrf.mxu0
      %v365 = vadd.f32 0.0, %v364
      %v366 = vpop.f32.mrf.mxu0
      %v367 = vpop.f32.mrf.mxu0
      %v368 = vadd.f32 0.0, %v367
      %v369 = vpop.f32.mrf.mxu0
      %370 = vmatprep.mubr.bf16.mxu0 0
      %371 = vmatmul.mubr.bf16.gmra.mxu0 %v282
      %v372 = vpop.f32.mrf.mxu0
      %v373 = vadd.f32 0.0, %v372
      %v374 = vpop.f32.mrf.mxu0
      %v375 = vpop.f32.mrf.mxu0
      %v376 = vadd.f32 0.0, %v375
      %v377 = vpop.f32.mrf.mxu0
      %378 = vmatprep.mubr.bf16.mxu0 0
      %379 = vmatmul.mubr.bf16.gmra.mxu0 %v285
      %v380 = vpop.f32.mrf.mxu0
      %v381 = vadd.f32 0.0, %v380
      %v382 = vpop.f32.mrf.mxu0
      %v383 = vpop.f32.mrf.mxu0
      %v384 = vadd.f32 0.0, %v383
      %v385 = vpop.f32.mrf.mxu0
      %386 = vmatprep.mubr.bf16.mxu0 0
      %387 = vmatmul.mubr.bf16.gmra.mxu0 %v288
      %v388 = vpop.f32.mrf.mxu0
      %v389 = vadd.f32 0.0, %v388
      %v390 = vpop.f32.mrf.mxu0
      %v391 = vpop.f32.mrf.mxu0
      %v392 = vadd.f32 0.0, %v391
      %v393 = vpop.f32.mrf.mxu0
      %394 = vmatprep.mubr.bf16.mxu0 0
      %395 = vmatmul.mubr.bf16.gmra.mxu0 %v291
      %v396 = vpop.f32.mrf.mxu0
      %v397 = vadd.f32 0.0, %v396
      %v398 = vpop.f32.mrf.mxu0
      %v399 = vpop.f32.mrf.mxu0
      %v400 = vadd.f32 0.0, %v399
      %v401 = vpop.f32.mrf.mxu0
      %402 = vmatprep.mubr.bf16.mxu0 0
      %403 = vmatmul.mubr.bf16.gmra.mxu0 %v294
      %v404 = vpop.f32.mrf.mxu0
      %v405 = vadd.f32 0.0, %v404
      %v406 = vpop.f32.mrf.mxu0
      %v407 = vpop.f32.mrf.mxu0
      %v408 = vadd.f32 0.0, %v407
      %v409 = vpop.f32.mrf.mxu0
      %410 = vmatprep.mubr.bf16.mxu0 0
      %411 = vmatmul.mubr.bf16.gmra.mxu0 %v297
      %v412 = vpop.f32.mrf.mxu0
      %v413 = vadd.f32 0.0, %v412
      %v414 = vpop.f32.mrf.mxu0
      %v415 = vpop.f32.mrf.mxu0
      %v416 = vadd.f32 0.0, %v415
      %v417 = vpop.f32.mrf.mxu0
      %418 = vmatprep.mubr.bf16.mxu0 0
      %419 = vmatmul.mubr.bf16.gmra.mxu0 %v300
      %v420 = vpop.f32.mrf.mxu0
      %v421 = vadd.f32 0.0, %v420
      %v422 = vpop.f32.mrf.mxu0
      %v423 = vpop.f32.mrf.mxu0
      %v424 = vadd.f32 0.0, %v423
      %v425 = vpop.f32.mrf.mxu0
      %426 = vmatprep.mubr.bf16.mxu0 0
      %427 = vmatmul.mubr.bf16.gmra.mxu0 %v303
      %v428 = vpop.f32.mrf.mxu0
      %v429 = vadd.f32 0.0, %v428
      %v430 = vpop.f32.mrf.mxu0
      %v431 = vpop.f32.mrf.mxu0
      %v432 = vadd.f32 0.0, %v431
      %v433 = vpop.f32.mrf.mxu0
      %434 = vmatprep.mubr.bf16.mxu0 0
      %435 = vmatmul.mubr.bf16.gmra.mxu0 %v306
      %v436 = vpop.f32.mrf.mxu0
      %v437 = vadd.f32 0.0, %v436
      %v438 = vpop.f32.mrf.mxu0
      %v439 = vpop.f32.mrf.mxu0
      %v440 = vadd.f32 0.0, %v439
      %v441 = vpop.f32.mrf.mxu0
      %442 = vmatprep.mubr.bf16.mxu0 0
      %443 = vmatmul.mubr.bf16.gmra.mxu0 %v309
      %v444 = vpop.f32.mrf.mxu0
      %v445 = vadd.f32 0.0, %v444
      %v446 = vpop.f32.mrf.mxu0
      %v447 = vpop.f32.mrf.mxu0
      %v448 = vadd.f32 0.0, %v447
      %v449 = vpop.f32.mrf.mxu0
      %450 = vmatprep.mubr.bf16.mxu0 0
      %451 = vmatmul.mubr.bf16.gmra.mxu0 %v312
      %v452 = vpop.f32.mrf.mxu0
      %v453 = vadd.f32 0.0, %v452
      %v454 = vpop.f32.mrf.mxu0
      %v455 = vpop.f32.mrf.mxu0
      %v456 = vadd.f32 0.0, %v455
      %v457 = vpop.f32.mrf.mxu0
      %458 = vmatprep.mubr.bf16.mxu0 0
      %459 = vmatmul.mubr.bf16.gmra.mxu0 %v315
      %v460 = vpop.f32.mrf.mxu0
      %v461 = vadd.f32 0.0, %v460
      %v462 = vpop.f32.mrf.mxu0
      %v463 = vpop.f32.mrf.mxu0
      %v464 = vadd.f32 0.0, %v463
      %v465 = vpop.f32.mrf.mxu0
      %466 = vmatprep.mubr.bf16.mxu0 0
      %467 = vmatmul.mubr.bf16.gmra.mxu0 %v318
      %v468 = vpop.f32.mrf.mxu0
      %v469 = vadd.f32 0.0, %v468
      %v470 = vpop.f32.mrf.mxu0
      %v471 = vpop.f32.mrf.mxu0
      %v472 = vadd.f32 0.0, %v471
      %v473 = vpop.f32.mrf.mxu0
      %474 = vmatprep.mubr.bf16.mxu0 0
      %475 = vmatmul.mubr.bf16.gmra.mxu0 %v321
      %v476 = vpop.f32.mrf.mxu0
      %v477 = vadd.f32 0.0, %v476
      %v478 = vpop.f32.mrf.mxu0
      %v479 = vpop.f32.mrf.mxu0
      %v480 = vadd.f32 0.0, %v479
      %v481 = vpop.f32.mrf.mxu0
      %482 = vmatprep.mubr.bf16.mxu0 0
      %483 = vmatmul.mubr.bf16.gmra.mxu0 %v324
      %v484 = vpop.f32.mrf.mxu0
      %v485 = vadd.f32 0.0, %v484
      %v486 = vpop.f32.mrf.mxu0
      %v487 = vpop.f32.mrf.mxu0
      %v488 = vadd.f32 0.0, %v487
      %v489 = vpop.f32.mrf.mxu0
      %490 = vdwg.mxu0
      %vm491 = vcmask 64512
      %v492 = vsel %vm491, %v365, 0.0
      %v493 = vsel %vm491, %v368, 0.0
      %v494 = vadd.f32 %v492, %v493
      %v495 = vsel %vm491, %v373, 0.0
      %v496 = vadd.f32 %v494, %v495
      %v497 = vsel %vm491, %v376, 0.0
      %v498 = vadd.f32 %v496, %v497
      %v499 = vsel %vm491, %v381, 0.0
      %v500 = vadd.f32 %v498, %v499
      %v501 = vsel %vm491, %v384, 0.0
      %v502 = vadd.f32 %v500, %v501
      %v503 = vsel %vm491, %v389, 0.0
      %v504 = vadd.f32 %v502, %v503
      %v505 = vsel %vm491, %v392, 0.0
      %v506 = vadd.f32 %v504, %v505
      %v507 = vsel %vm491, %v397, 0.0
      %v508 = vadd.f32 %v506, %v507
      %v509 = vsel %vm491, %v400, 0.0
      %v510 = vadd.f32 %v508, %v509
      %v511 = vsel %vm491, %v405, 0.0
      %v512 = vadd.f32 %v510, %v511
      %v513 = vsel %vm491, %v408, 0.0
      %v514 = vadd.f32 %v512, %v513
      %v515 = vsel %vm491, %v413, 0.0
      %v516 = vadd.f32 %v514, %v515
      %v517 = vsel %vm491, %v416, 0.0
      %v518 = vadd.f32 %v516, %v517
      %v519 = vsel %vm491, %v421, 0.0
      %v520 = vadd.f32 %v518, %v519
      %v521 = vsel %vm491, %v424, 0.0
      %v522 = vadd.f32 %v520, %v521
      %v523 = vsel %vm491, %v429, 0.0
      %v524 = vadd.f32 %v522, %v523
      %v525 = vsel %vm491, %v432, 0.0
      %v526 = vadd.f32 %v524, %v525
      %v527 = vsel %vm491, %v437, 0.0
      %v528 = vadd.f32 %v526, %v527
      %v529 = vsel %vm491, %v440, 0.0
      %v530 = vadd.f32 %v528, %v529
      %v531 = vsel %vm491, %v445, 0.0
      %v532 = vadd.f32 %v530, %v531
      %v533 = vsel %vm491, %v448, 0.0
      %v534 = vadd.f32 %v532, %v533
      %v535 = vsel %vm491, %v453, 0.0
      %v536 = vadd.f32 %v534, %v535
      %v537 = vsel %vm491, %v456, 0.0
      %v538 = vadd.f32 %v536, %v537
      %v539 = vsel %vm491, %v461, 0.0
      %v540 = vadd.f32 %v538, %v539
      %v541 = vsel %vm491, %v464, 0.0
      %v542 = vadd.f32 %v540, %v541
      %v543 = vsel %vm491, %v469, 0.0
      %v544 = vadd.f32 %v542, %v543
      %v545 = vsel %vm491, %v472, 0.0
      %v546 = vadd.f32 %v544, %v545
      %v547 = vsel %vm491, %v477, 0.0
      %v548 = vadd.f32 %v546, %v547
      %v549 = vsel %vm491, %v480, 0.0
      %v550 = vadd.f32 %v548, %v549
      %v551 = vsel %vm491, %v485, 0.0
      %v552 = vadd.f32 %v550, %v551
      %v553 = vsel %vm491, %v488, 0.0
      %v554 = vadd.f32 %v552, %v553
      %v555 = vrot.slane %v554, 4
      %v556 = vadd.f32 %v554, %v555
      %v557 = vrot.slane %v556, 2
      %v558 = vadd.f32 %v556, %v557
      %v559 = vrot.slane %v558, 1
      %v560 = vadd.f32 %v558, %v559
      %v561 = vmul.f32 %v365, %v365
      %v562 = vmul.f32 %v368, %v368
      %v563 = vmul.f32 %v373, %v373
      %v564 = vmul.f32 %v376, %v376
      %v565 = vmul.f32 %v381, %v381
      %v566 = vmul.f32 %v384, %v384
      %v567 = vmul.f32 %v389, %v389
      %v568 = vmul.f32 %v392, %v392
      %v569 = vmul.f32 %v397, %v397
      %v570 = vmul.f32 %v400, %v400
      %v571 = vmul.f32 %v405, %v405
      %v572 = vmul.f32 %v408, %v408
      %v573 = vmul.f32 %v413, %v413
      %v574 = vmul.f32 %v416, %v416
      %v575 = vmul.f32 %v421, %v421
      %v576 = vmul.f32 %v424, %v424
      %v577 = vmul.f32 %v429, %v429
      %v578 = vmul.f32 %v432, %v432
      %v579 = vmul.f32 %v437, %v437
      %v580 = vmul.f32 %v440, %v440
      %v581 = vmul.f32 %v445, %v445
      %v582 = vmul.f32 %v448, %v448
      %v583 = vmul.f32 %v453, %v453
      %v584 = vmul.f32 %v456, %v456
      %v585 = vmul.f32 %v461, %v461
      %v586 = vmul.f32 %v464, %v464
      %v587 = vmul.f32 %v469, %v469
      %v588 = vmul.f32 %v472, %v472
      %v589 = vmul.f32 %v477, %v477
      %v590 = vmul.f32 %v480, %v480
      %v591 = vmul.f32 %v485, %v485
      %v592 = vmul.f32 %v488, %v488
      %v593 = vsel %vm491, %v561, 0.0
      %v594 = vsel %vm491, %v562, 0.0
      %v595 = vadd.f32 %v593, %v594
      %v596 = vsel %vm491, %v563, 0.0
      %v597 = vadd.f32 %v595, %v596
      %v598 = vsel %vm491, %v564, 0.0
      %v599 = vadd.f32 %v597, %v598
      %v600 = vsel %vm491, %v565, 0.0
      %v601 = vadd.f32 %v599, %v600
      %v602 = vsel %vm491, %v566, 0.0
      %v603 = vadd.f32 %v601, %v602
      %v604 = vsel %vm491, %v567, 0.0
      %v605 = vadd.f32 %v603, %v604
      %v606 = vsel %vm491, %v568, 0.0
      %v607 = vadd.f32 %v605, %v606
      %v608 = vsel %vm491, %v569, 0.0
      %v609 = vadd.f32 %v607, %v608
      %v610 = vsel %vm491, %v570, 0.0
      %v611 = vadd.f32 %v609, %v610
      %v612 = vsel %vm491, %v571, 0.0
      %v613 = vadd.f32 %v611, %v612
      %v614 = vsel %vm491, %v572, 0.0
      %v615 = vadd.f32 %v613, %v614
      %v616 = vsel %vm491, %v573, 0.0
      %v617 = vadd.f32 %v615, %v616
      %v618 = vsel %vm491, %v574, 0.0
      %v619 = vadd.f32 %v617, %v618
      %v620 = vsel %vm491, %v575, 0.0
      %v621 = vadd.f32 %v619, %v620
      %v622 = vsel %vm491, %v576, 0.0
      %v623 = vadd.f32 %v621, %v622
      %v624 = vsel %vm491, %v577, 0.0
      %v625 = vadd.f32 %v623, %v624
      %v626 = vsel %vm491, %v578, 0.0
      %v627 = vadd.f32 %v625, %v626
      %v628 = vsel %vm491, %v579, 0.0
      %v629 = vadd.f32 %v627, %v628
      %v630 = vsel %vm491, %v580, 0.0
      %v631 = vadd.f32 %v629, %v630
      %v632 = vsel %vm491, %v581, 0.0
      %v633 = vadd.f32 %v631, %v632
      %v634 = vsel %vm491, %v582, 0.0
      %v635 = vadd.f32 %v633, %v634
      %v636 = vsel %vm491, %v583, 0.0
      %v637 = vadd.f32 %v635, %v636
      %v638 = vsel %vm491, %v584, 0.0
      %v639 = vadd.f32 %v637, %v638
      %v640 = vsel %vm491, %v585, 0.0
      %v641 = vadd.f32 %v639, %v640
      %v642 = vsel %vm491, %v586, 0.0
      %v643 = vadd.f32 %v641, %v642
      %v644 = vsel %vm491, %v587, 0.0
      %v645 = vadd.f32 %v643, %v644
      %v646 = vsel %vm491, %v588, 0.0
      %v647 = vadd.f32 %v645, %v646
      %v648 = vsel %vm491, %v589, 0.0
      %v649 = vadd.f32 %v647, %v648
      %v650 = vsel %vm491, %v590, 0.0
      %v651 = vadd.f32 %v649, %v650
      %v652 = vsel %vm491, %v591, 0.0
      %v653 = vadd.f32 %v651, %v652
      %v654 = vsel %vm491, %v592, 0.0
      %v655 = vadd.f32 %v653, %v654
      %v656 = vrot.slane %v655, 4
      %v657 = vadd.f32 %v655, %v656
      %v658 = vrot.slane %v657, 2
      %v659 = vadd.f32 %v657, %v658
      %v660 = vrot.slane %v659, 1
      %v661 = vadd.f32 %v659, %v660
      %v662 = vlaneseq
      %v663 = vshrl.u32 %v662, 7
      %vm664 = vcmp.lt.s32.totalorder %v663, 4
      %v665 = vsel %vm664, %v560, %v661
      %666 = vst.msk [vmem:[%s143] sm:$0xff] %vm491, %v665
      %p667 = scmp.lt.s32.totalorder %s13, 1
      %s668 = scalar_select %p667, %s13, 1
      %s669 = smul.addr %s668, 8
      %s670 = scalar_lea.vmem %s2, %s669
      // Predicated region
      $region29: #{tpu_custom_call.1} parent=27 // pred_check
        %p671 = pneg %p78
      $region30: #{tpu_custom_call.1} parent=27 // pred_check_branch
        %673 = sbr.rel (%p671) target = $region32
      $region31: #{tpu_custom_call.1} parent=27 // pred_region
        _
      $region32: #{tpu_custom_call.1} parent=27 // pred_fallthru
        _
    $region28: #{tpu_custom_call.1} parent=5 // pred_fallthru
      _
    %p674 = scmp.le.s32.totalorder 2, %s8
    // Predicated region
    $region33: #{tpu_custom_call.1} parent=5 // pred_check
      %p675 = pneg %p674
    $region34: #{tpu_custom_call.1} parent=5 // pred_check_branch
      %677 = sbr.rel (%p675) target = $region36
    $region35: #{tpu_custom_call.1} parent=5 // pred_region
      %s678 = ssub.s32 %s8, 2
      // Predicated region
      $region37: #{tpu_custom_call.1} parent=35 // pred_check
        %p679 = pneg %p84
      $region38: #{tpu_custom_call.1} parent=35 // pred_check_branch
        %681 = sbr.rel (%p679) target = $region40
      $region39: #{tpu_custom_call.1} parent=35 // pred_region
        %p682 = scmp.lt.s32.totalorder %s14, 1
        %s683 = scalar_select %p682, %s14, 1
        %s684 = smul.addr %s683, 8
        %s685 = scalar_lea.vmem %s2, %s684
      $region40: #{tpu_custom_call.1} parent=35 // pred_fallthru
        _
    $region36: #{tpu_custom_call.1} parent=5 // pred_fallthru
      _
  $region6: #{tpu_custom_call.1} parent=0 // loop_footer
    %s12 = sadd.s32 1, %s8
  $region7: #{tpu_custom_call.1} parent=0 // loop_footer_branch
    %7 = sbr.rel target = $region3
  $region8: #{tpu_custom_call.1} parent=0 // loop_exit
    _

</llo_original>
